<compile_context>
chip_gen: v5e
topology: v5e:2x2
jax: 0.10.0
libtpu: 0.0.40
codegen_flags: <defaults>
</compile_context>

<pallas_src>
import jax
import jax.numpy as jnp
from jax.experimental import pallas as pl
from jax.experimental.pallas import tpu as pltpu


# ------------------------------ Pallas kernel -------------------------------

def _tv_frac_kernel(x_ref, prev_ref, out_ref):
    # x_ref    : (TM, W)  row tile of x, global rows [i*TM, (i+1)*TM)
    # prev_ref : (PB, W)  block whose LAST row is global row i*TM - 1
    #                     (ignored for i == 0)
    # out_ref  : (8,  W)  per-tile partials:
    #                     row 0 = height-direction lane sums
    #                     row 1 = width-direction  lane sums (lanes 0..W-2)
    i = pl.program_id(0)
    x = x_ref[...].astype(jnp.float32)                    # (TM, W)
    w = x.shape[1]
    eps = jnp.float32(1e-10)

    out_ref[...] = jnp.zeros_like(out_ref)

    # ---- width-direction TV: fully intra-tile, along the lane axis ----------
    vw = jnp.sqrt(jnp.abs(x[:, 1:] - x[:, :-1]) + eps)    # (TM, W-1)
    out_ref[1:2, 0:w - 1] = jnp.sum(vw, axis=0, keepdims=True)

    # ---- height-direction TV: intra-tile row pairs ---------------------------
    vh = jnp.sqrt(jnp.abs(x[1:, :] - x[:-1, :]) + eps)    # (TM-1, W)
    out_ref[0:1, :] = jnp.sum(vh, axis=0, keepdims=True)

    # ---- height pair straddling the tile boundary ----------------------------
    pb = prev_ref.shape[0]

    @pl.when(i > 0)
    def _boundary():
        prev_last = prev_ref[pb - 1:pb, :].astype(jnp.float32)       # (1, W)
        bterm = jnp.sqrt(jnp.abs(x[0:1, :] - prev_last) + eps)       # (1, W)
        out_ref[0:1, :] = out_ref[0:1, :] + bterm


# --------------------------------- wrapper ----------------------------------

def _pick_tile_rows(H, W):
    """Largest multiple-of-8 divisor of H whose (rows, W) f32 tile is <= ~4 MiB."""
    cap_rows = max(8, min(1024, (4 * 1024 * 1024) // max(W * 4, 1)))
    tm = None
    for cand in range(8, min(H, cap_rows) + 1, 8):
        if H % cand == 0:
            tm = cand
    return tm if tm is not None else H


def tv_frac_loss(x, tv_weight=1.0, *, tile_rows=None):
    """Pallas implementation of L_TV_frac.forward for a 2-D (H, W) input."""
    # TODO(synk): the PyTorch module nominally accepts >2-D inputs (it only
    # slices dims 0/1); this kernel implements the canonical 2-D case.
    assert x.ndim == 2, "L_TV_frac kernel expects a 2-D (H, W) input"
    H, W = x.shape
    assert H >= 2 and W >= 2, "TV loss needs at least 2 rows and 2 columns"
    x = x.astype(jnp.float32)

    tm = _pick_tile_rows(H, W) if tile_rows is None else int(tile_rows)
    # Tiled path needs tm % 8 == 0 and H % tm == 0; otherwise use a single
    # full-array block (block shape == full array dims is always legal).
    if tm <= 0 or H % tm != 0 or (tm % 8 != 0 and tm != H):
        tm = H
    ngrid = H // tm
    pb = 8 if H % 8 == 0 else H          # boundary-row block (only read, i > 0)

    cost = pl.CostEstimate(
        flops=8 * H * W,                 # sub/abs/add/reduce per element, 2 dirs
        transcendentals=2 * H * W,       # two sqrt passes over ~H*W elements
        bytes_accessed=H * W * 4,        # x is streamed essentially once
    )

    out = pl.pallas_call(
        _tv_frac_kernel,
        out_shape=jax.ShapeDtypeStruct((ngrid * 8, W), jnp.float32),
        grid=(ngrid,),
        in_specs=[
            pl.BlockSpec((tm, W), lambda i: (i, 0)),
            # 8-row block ending at global row i*tm - 1 (clamped at step 0).
            pl.BlockSpec((pb, W), lambda i: (jnp.maximum(i * (tm // 8) - 1, 0), 0)),
        ],
        out_specs=pl.BlockSpec((8, W), lambda i: (i, 0)),
        compiler_params=pltpu.CompilerParams(
            dimension_semantics=("parallel",),   # independent steps -> megacore
            vmem_limit_bytes=32 * 1024 * 1024,
        ),
        cost_estimate=cost,
    )(x, x)

    parts = out.reshape(ngrid, 8, W)
    h_tv = jnp.sum(parts[:, 0, :])
    w_tv = jnp.sum(parts[:, 1, :])
    count_h = (H - 1) * W
    count_w = H * (W - 1)
    return tv_weight * 2.0 * (h_tv / count_h + w_tv / count_w)


# --------------------------- pure-JAX reference ------------------------------

def _tv_frac_reference(x, tv_weight=1.0):
    H, W = x.shape
    h_tv = jnp.sum(jnp.sqrt(jnp.abs(x[1:, :] - x[:-1, :]) + 1e-10))
    w_tv = jnp.sum(jnp.sqrt(jnp.abs(x[:, 1:] - x[:, :-1]) + 1e-10))
    return tv_weight * 2.0 * (h_tv / ((H - 1) * W) + w_tv / (H * (W - 1)))


# ----------------------------------- main ------------------------------------

if __name__ == "__main__":
    key = jax.random.PRNGKey(0)
    k1, k2 = jax.random.split(key)

    # Tiled path: 4 grid steps exercise the cross-tile boundary term.
    H1, W1 = 256, 256
    x1 = jax.random.normal(k1, (H1, W1), jnp.float32)
    out1 = jax.jit(lambda v: tv_frac_loss(v, tv_weight=1.0, tile_rows=64))(x1)
    jax.block_until_ready(out1)
    ref1 = _tv_frac_reference(x1, 1.0)
    assert out1.shape == (), out1.shape
    assert bool(jnp.isfinite(out1)), out1
    assert jnp.allclose(out1, ref1, rtol=1e-3, atol=1e-5), (float(out1), float(ref1))

    # Ragged width (not a multiple of 128) with a multi-step grid: full-width
    # blocks keep the tiled path legal.
    H2, W2 = 120, 200
    x2 = jax.random.normal(k2, (H2, W2), jnp.float32)
    out2 = jax.jit(lambda v: tv_frac_loss(v, tv_weight=0.5, tile_rows=40))(x2)
    jax.block_until_ready(out2)
    ref2 = _tv_frac_reference(x2, 0.5)
    assert bool(jnp.isfinite(out2)), out2
    assert jnp.allclose(out2, ref2, rtol=1e-3, atol=1e-5), (float(out2), float(ref2))

    print("KERNEL_OK")
</pallas_src>

<mosaic_0001>
module attributes {stable_mosaic.version = 11 : i64} {
  func.func @_tv_frac_kernel(%arg0: i32, %arg1: memref<64x256xf32, #tpu.memory_space<vmem>>, %arg2: memref<8x256xf32, #tpu.memory_space<vmem>>, %arg3: memref<8x256xf32, #tpu.memory_space<vmem>>) attributes {dimension_semantics = [#tpu.dimension_semantics<parallel>], iteration_bounds = array<i64: 4>, scalar_prefetch = 0 : i64, scratch_operands = 0 : i64, tpu.core_type = #tpu.core_type<tc>, window_params = [{transform_indices = @transform_0, window_bounds = array<i64: 64, 256>}, {transform_indices = @transform_1, window_bounds = array<i64: 8, 256>}, {transform_indices = @transform_2, window_bounds = array<i64: 8, 256>}]} {
    %c0 = arith.constant 0 : index
    %c0_0 = arith.constant 0 : index
    %0 = vector.load %arg1[%c0, %c0_0] : memref<64x256xf32, #tpu.memory_space<vmem>>, vector<64x256xf32>
    %cst = arith.constant 0.000000e+00 : f32
    %1 = vector.broadcast %cst : f32 to vector<8x256xf32>
    %c0_1 = arith.constant 0 : index
    %c0_2 = arith.constant 0 : index
    %2 = vector.load %arg3[%c0_1, %c0_2] : memref<8x256xf32, #tpu.memory_space<vmem>>, vector<8x256xf32>
    tpu.vector_store %arg3[%c0_1, %c0_2], %1 {strides = array<i32>} : memref<8x256xf32, #tpu.memory_space<vmem>>, vector<8x256xf32>,
    %3 = vector.extract_strided_slice %0 {offsets = [0, 1], sizes = [64, 255], strides = [1, 1]} : vector<64x256xf32> to vector<64x255xf32>
    %4 = vector.extract_strided_slice %0 {offsets = [0, 0], sizes = [64, 255], strides = [1, 1]} : vector<64x256xf32> to vector<64x255xf32>
    %5 = arith.subf %3, %4 : vector<64x255xf32>
    %6 = math.absf %5 : vector<64x255xf32>
    %cst_3 = arith.constant 1.000000e-10 : f32
    %7 = vector.broadcast %cst_3 : f32 to vector<64x255xf32>
    %8 = arith.addf %6, %7 : vector<64x255xf32>
    %9 = math.sqrt %8 : vector<64x255xf32>
    %cst_4 = arith.constant dense<0.000000e+00> : vector<255xf32>
    %10 = vector.multi_reduction <add>, %9, %cst_4 [0] : vector<64x255xf32> to vector<255xf32>
    %11 = vector.shape_cast %10 : vector<255xf32> to vector<1x255xf32>
    %c1 = arith.constant 1 : index
    %c0_5 = arith.constant 0 : index
    %12 = vector.load %arg3[%c1, %c0_5] : memref<8x256xf32, #tpu.memory_space<vmem>>, vector<1x255xf32>
    tpu.vector_store %arg3[%c1, %c0_5], %11 {strides = array<i32>} : memref<8x256xf32, #tpu.memory_space<vmem>>, vector<1x255xf32>,
    %13 = vector.extract_strided_slice %0 {offsets = [1, 0], sizes = [63, 256], strides = [1, 1]} : vector<64x256xf32> to vector<63x256xf32>
    %14 = vector.extract_strided_slice %0 {offsets = [0, 0], sizes = [63, 256], strides = [1, 1]} : vector<64x256xf32> to vector<63x256xf32>
    %15 = arith.subf %13, %14 : vector<63x256xf32>
    %16 = math.absf %15 : vector<63x256xf32>
    %cst_6 = arith.constant 1.000000e-10 : f32
    %17 = vector.broadcast %cst_6 : f32 to vector<63x256xf32>
    %18 = arith.addf %16, %17 : vector<63x256xf32>
    %19 = math.sqrt %18 : vector<63x256xf32>
    %cst_7 = arith.constant dense<0.000000e+00> : vector<256xf32>
    %20 = vector.multi_reduction <add>, %19, %cst_7 [0] : vector<63x256xf32> to vector<256xf32>
    %21 = vector.shape_cast %20 : vector<256xf32> to vector<1x256xf32>
    %c0_8 = arith.constant 0 : index
    %c0_9 = arith.constant 0 : index
    %22 = vector.load %arg3[%c0_8, %c0_9] : memref<8x256xf32, #tpu.memory_space<vmem>>, vector<1x256xf32>
    tpu.vector_store %arg3[%c0_8, %c0_9], %21 {strides = array<i32>} : memref<8x256xf32, #tpu.memory_space<vmem>>, vector<1x256xf32>,
    %c0_i32 = arith.constant 0 : i32
    %23 = arith.cmpi sgt, %arg0, %c0_i32 : i32
    %24 = arith.extui %23 : i1 to i32
    %cst_10 = arith.constant 1.000000e-10 : f32
    %c0_i32_11 = arith.constant 0 : i32
    %25 = arith.cmpi ne, %24, %c0_i32_11 : i32
    scf.if %25 {
      %c7 = arith.constant 7 : index
      %c0_12 = arith.constant 0 : index
      %26 = vector.load %arg2[%c7, %c0_12] : memref<8x256xf32, #tpu.memory_space<vmem>>, vector<1x256xf32>
      %27 = vector.extract_strided_slice %0 {offsets = [0, 0], sizes = [1, 256], strides = [1, 1]} : vector<64x256xf32> to vector<1x256xf32>
      %28 = arith.subf %27, %26 : vector<1x256xf32>
      %29 = math.absf %28 : vector<1x256xf32>
      %30 = vector.broadcast %cst_10 : f32 to vector<1x256xf32>
      %31 = arith.addf %29, %30 : vector<1x256xf32>
      %32 = math.sqrt %31 : vector<1x256xf32>
      %c0_13 = arith.constant 0 : index
      %c0_14 = arith.constant 0 : index
      %33 = vector.load %arg3[%c0_13, %c0_14] : memref<8x256xf32, #tpu.memory_space<vmem>>, vector<1x256xf32>
      %34 = arith.addf %33, %32 : vector<1x256xf32>
      %c0_15 = arith.constant 0 : index
      %c0_16 = arith.constant 0 : index
      %35 = vector.load %arg3[%c0_15, %c0_16] : memref<8x256xf32, #tpu.memory_space<vmem>>, vector<1x256xf32>
      tpu.vector_store %arg3[%c0_15, %c0_16], %34 {strides = array<i32>} : memref<8x256xf32, #tpu.memory_space<vmem>>, vector<1x256xf32>,
    } else {
    }
    return
  }
  func.func @transform_0(%arg0: i32) -> (i32, i32) {
    %c0_i32 = arith.constant 0 : i32
    %c0_i32_0 = arith.constant 0 : i32
    return %arg0, %c0_i32 : i32, i32
  }
  func.func @transform_1(%arg0: i32) -> (i32, i32) {
    %c8_i32 = arith.constant 8 : i32
    %0 = arith.muli %arg0, %c8_i32 : i32
    %c1_i32 = arith.constant 1 : i32
    %1 = arith.subi %0, %c1_i32 : i32
    %c0_i32 = arith.constant 0 : i32
    %2 = arith.maxsi %1, %c0_i32 : i32
    %c0_i32_0 = arith.constant 0 : i32
    %c0_i32_1 = arith.constant 0 : i32
    return %2, %c0_i32_0 : i32, i32
  }
  func.func @transform_2(%arg0: i32) -> (i32, i32) {
    %c0_i32 = arith.constant 0 : i32
    %c0_i32_0 = arith.constant 0 : i32
    return %arg0, %c0_i32 : i32, i32
  }
}

</mosaic_0001>

<llo_original>
// kernel: _lambda_.1
$region0: #{_lambda_.1}
  #allocation0 [shape = 'u32[]', space=smem, size = 0x4, offset = 0x4, fixed_abs, tag = 'smem constant byte address 0x4 - core index']
  #allocation1 [shape = 'u32[72,128]{1,0:T(1,128)}', space=vmem, size = 0x9000, scoped, tag = 'internal scratch']
  %s0 = inlined_call_operand.hbm [shape: f32[256,256], index: 0, kind: input, shape index: {}, may-alias: {0,1}]
  %s1 = inlined_call_operand.hbm [shape: f32[256,256], index: 1, kind: input, shape index: {}, may-alias: {0,1}]
  %s2 = inlined_call_operand.vmem [shape: f32[32,256], index: 2, kind: output, shape index: {}]
  %s3 = sld [smem:[#allocation0]]
  $region53: #{_lambda_.1} parent=0
    _
  %s5 = ssub.s32 1, %s3
  %s6 = scalar_select 0, %s5, %s3
  $region1: #{_lambda_.1} parent=0
    #allocation2 [shape = 'u8[131072]{0}', space=vmem, size = 0x20000, scoped, tag = 'input window, operand 0']
    #allocation3 [shape = 's32[2]{0}', space=sflag, size = 0x8, scoped, tag = 'scoped memory for _lambda_.1']
    #allocation4 [shape = 'u8[16384]{0}', space=vmem, size = 0x4000, scoped, tag = 'input window, operand 1']
    #allocation5 [shape = 's32[2]{0}', space=sflag, size = 0x8, scoped, tag = 'scoped memory for _lambda_.1']
    %7 = vsyncpa [#allocation3], 0
    %s8 = scalar_lea.sflag [#allocation3], 1
    %9 = vsyncpa %s8, 0
    %10 = vsyncpa [#allocation5], 0
    %s11 = scalar_lea.sflag [#allocation5], 1
    %12 = vsyncpa %s11, 0
    loop: start=0, step=1, limit=6
    $region2: #{_lambda_.1} parent=1 // loop_pre_header
      _
    $region3: #{_lambda_.1} parent=1 // loop_header
      %s14 = sphi 0, %s18
      %p15 = scmp.ge.s32.totalorder %s14, 6
      %s24 = sphi 0, %s26
      %s27 = sphi 0, %s24
      %s28 = sphi 0, %s27
      %s44 = sphi 0, %s28
      %s58 = sphi 0, %s60
      %s61 = sphi 0, %s58
      %s62 = sphi 0, %s61
      %s78 = sphi 0, %s62
      %s84 = sphi 0, %s86
      %s87 = sphi 0, %s84
      %s88 = sphi 0, %s87
      %s104 = sphi 0, %s88
    $region4: #{_lambda_.1} parent=1 // loop_header_branch
      %17 = sbr.rel (%p15) target = $region8
    $region5: #{_lambda_.1} parent=1 // loop_body
      %s19 = ssub.s32 %s14, 1
      %s20 = ssub.s32 %s14, 2
      %s21 = sadd.s32 %s14, 1
      %s22 = ssub.s32 %s14, %s21
      %p23 = scmp.eq.s32.totalorder %s22, 0
      %s25 = sadd.s32 %s24, 1
      %s26 = scalar_select %p23, %s24, %s25
      %p29 = pneg %p23
      %p30 = scmp.eq.s32.totalorder %s14, 3
      %p31 = por %p29, %p30
      %p32 = scmp.ne.s32.totalorder %s24, %s27
      %p33 = scmp.eq.s32.totalorder %s14, 0
      %p34 = por %p32, %p33
      %p35 = scmp.ne.s32.totalorder %s24, %s27
      %p36 = scmp.eq.s32.totalorder %s19, 3
      %p37 = por %p35, %p36
      %p38 = scmp.ne.s32.totalorder %s27, %s28
      %p39 = scmp.eq.s32.totalorder %s19, 0
      %p40 = por %p38, %p39
      %p41 = scmp.ne.s32.totalorder %s27, %s28
      %p42 = scmp.eq.s32.totalorder %s20, 3
      %p43 = por %p41, %p42
      %p45 = scmp.ne.s32.totalorder %s28, %s44
      %p46 = scmp.eq.s32.totalorder %s20, 0
      %p47 = por %p45, %p46
      %s48 = smul.u32 %s14, 8
      %s49 = ssub.s32 %s48, 1
      %p50 = scmp.gt.s32.totalorder %s49, 0
      %s51 = scalar_select %p50, %s49, 0
      %s52 = smul.u32 %s21, 8
      %s53 = ssub.s32 %s52, 1
      %p54 = scmp.gt.s32.totalorder %s53, 0
      %s55 = scalar_select %p54, %s53, 0
      %s56 = ssub.s32 %s51, %s55
      %p57 = scmp.eq.s32.totalorder %s56, 0
      %s59 = sadd.s32 %s58, 1
      %s60 = scalar_select %p57, %s58, %s59
      %p63 = pneg %p57
      %p64 = scmp.eq.s32.totalorder %s14, 3
      %p65 = por %p63, %p64
      %p66 = scmp.ne.s32.totalorder %s58, %s61
      %p67 = scmp.eq.s32.totalorder %s14, 0
      %p68 = por %p66, %p67
      %p69 = scmp.ne.s32.totalorder %s58, %s61
      %p70 = scmp.eq.s32.totalorder %s19, 3
      %p71 = por %p69, %p70
      %p72 = scmp.ne.s32.totalorder %s61, %s62
      %p73 = scmp.eq.s32.totalorder %s19, 0
      %p74 = por %p72, %p73
      %p75 = scmp.ne.s32.totalorder %s61, %s62
      %p76 = scmp.eq.s32.totalorder %s20, 3
      %p77 = por %p75, %p76
      %p79 = scmp.ne.s32.totalorder %s62, %s78
      %p80 = scmp.eq.s32.totalorder %s20, 0
      %p81 = por %p79, %p80
      %s82 = ssub.s32 %s14, %s21
      %p83 = scmp.eq.s32.totalorder %s82, 0
      %s85 = sadd.s32 %s84, 1
      %s86 = scalar_select %p83, %s84, %s85
      %p89 = pneg %p83
      %p90 = scmp.eq.s32.totalorder %s14, 3
      %p91 = por %p89, %p90
      %p92 = scmp.ne.s32.totalorder %s84, %s87
      %p93 = scmp.eq.s32.totalorder %s14, 0
      %p94 = por %p92, %p93
      %p95 = scmp.ne.s32.totalorder %s84, %s87
      %p96 = scmp.eq.s32.totalorder %s19, 3
      %p97 = por %p95, %p96
      %p98 = scmp.ne.s32.totalorder %s87, %s88
      %p99 = scmp.eq.s32.totalorder %s19, 0
      %p100 = por %p98, %p99
      %p101 = scmp.ne.s32.totalorder %s87, %s88
      %p102 = scmp.eq.s32.totalorder %s20, 3
      %p103 = por %p101, %p102
      %p105 = scmp.ne.s32.totalorder %s88, %s104
      %p106 = scmp.eq.s32.totalorder %s20, 0
      %p107 = por %p105, %p106
      %p108 = scmp.le.s32.totalorder 1, %s14
      %p109 = scmp.lt.s32.totalorder %s14, 5
      %p110 = pnand %p108, %p109
      %p111 = pneg %p110
      // Predicated region
      $region9: #{_lambda_.1} parent=5 // pred_check
        _
      $region10: #{_lambda_.1} parent=5 // pred_check_branch
        %113 = sbr.rel (%p110) target = $region12
      $region11: #{_lambda_.1} parent=5 // pred_region
        %s114 = ssub.s32 %s14, 1
      $region12: #{_lambda_.1} parent=5 // pred_fallthru
        _
      %p115 = scmp.lt.s32.totalorder %s14, 4
      // Predicated region
      $region13: #{_lambda_.1} parent=5 // pred_check
        %p116 = pneg %p115
      $region14: #{_lambda_.1} parent=5 // pred_check_branch
        %118 = sbr.rel (%p116) target = $region16
      $region15: #{_lambda_.1} parent=5 // pred_region
        // Predicated region
        $region17: #{_lambda_.1} parent=15 // pred_check
          %p119 = pneg %p34
        $region18: #{_lambda_.1} parent=15 // pred_check_branch
          %121 = sbr.rel (%p119) target = $region20
        $region19: #{_lambda_.1} parent=15 // pred_region
          %s122 = sand.u32 %s24, 1
          %s123 = scalar_lea.sflag [#allocation3], %s122
          %s124 = sand.u32 %s24, 1
          %s125 = smul.addr %s124, 128
          %s126 = scalar_lea.vmem [#allocation2], %s125
          %s127 = smul.u32 8, %s14
          %129 = vsyncadd %s123, 0
          %s130 = smul.addr %s127, 2
          %s131 = smul.addr %s130, 8
          %s132 = scalar_lea.hbm %s0, %s131
          %s133 = sshll.u32 %s132, 4
          %s134 = int_to_ptr.hbm [resolvable:$true] %s133
          %s135 = sshll.u32 %s126, 4
          %s136 = int_to_ptr.vmem [resolvable:$true] %s135
          %141 = dma.hbm_to_vmem [thread:$0]  %s134, 2048, %s136, %s123, 256, 256, 16
        $region20: #{_lambda_.1} parent=15 // pred_fallthru
          _
        // Predicated region
        $region21: #{_lambda_.1} parent=15 // pred_check
          %p142 = pneg %p68
        $region22: #{_lambda_.1} parent=15 // pred_check_branch
          %144 = sbr.rel (%p142) target = $region24
        $region23: #{_lambda_.1} parent=15 // pred_region
          %s145 = sand.u32 %s58, 1
          %s146 = scalar_lea.sflag [#allocation5], %s145
          %s147 = sand.u32 %s58, 1
          %s148 = smul.addr %s147, 16
          %s149 = scalar_lea.vmem [#allocation4], %s148
          %s150 = smul.u32 %s14, 8
          %s151 = ssub.s32 %s150, 1
          %p152 = scmp.gt.s32.totalorder %s151, 0
          %s153 = scalar_select %p152, %s151, 0
          %155 = vsyncadd %s146, 0
          %s156 = smul.addr %s153, 2
          %s157 = smul.addr %s156, 8
          %s158 = scalar_lea.hbm %s1, %s157
          %s160 = sshll.u32 %s158, 4
          %s161 = int_to_ptr.hbm [resolvable:$true] %s160
          %s162 = sshll.u32 %s149, 4
          %s163 = int_to_ptr.vmem [resolvable:$true] %s162
          %165 = dma.hbm_to_vmem [thread:$0]  %s161, 256, %s163, %s146
        $region24: #{_lambda_.1} parent=15 // pred_fallthru
          _
      $region16: #{_lambda_.1} parent=5 // pred_fallthru
        _
      %p166 = scmp.le.s32.totalorder 1, %s14
      %p167 = scmp.lt.s32.totalorder %s14, 5
      %p168 = pnand %p166, %p167
      %p169 = pneg %p168
      // Predicated region
      $region25: #{_lambda_.1} parent=5 // pred_check
        _
      $region26: #{_lambda_.1} parent=5 // pred_check_branch
        %171 = sbr.rel (%p168) target = $region28
      $region27: #{_lambda_.1} parent=5 // pred_region
        %s172 = ssub.s32 %s14, 1
        %s173 = sand.u32 %s27, 1
        %s174 = scalar_lea.sflag [#allocation3], %s173
        %s175 = sand.u32 %s27, 1
        %s176 = smul.addr %s175, 128
        %s177 = scalar_lea.vmem [#allocation2], %s176
        // Predicated region
        $region29: #{_lambda_.1} parent=27 // pred_check
          %p178 = pneg %p40
        $region30: #{_lambda_.1} parent=27 // pred_check_branch
          %180 = sbr.rel (%p178) target = $region32
        $region31: #{_lambda_.1} parent=27 // pred_region
          %182 = dma.done %s174, 2048
        $region32: #{_lambda_.1} parent=27 // pred_fallthru
          _
        %s183 = sand.u32 %s61, 1
        %s184 = scalar_lea.sflag [#allocation5], %s183
        %s185 = sand.u32 %s61, 1
        %s186 = smul.addr %s185, 16
        %s187 = scalar_lea.vmem [#allocation4], %s186
        // Predicated region
        $region33: #{_lambda_.1} parent=27 // pred_check
          %p188 = pneg %p74
        $region34: #{_lambda_.1} parent=27 // pred_check_branch
          %190 = sbr.rel (%p188) target = $region36
        $region35: #{_lambda_.1} parent=27 // pred_region
          %192 = dma.done %s184, 256
        $region36: #{_lambda_.1} parent=27 // pred_fallthru
          _
        %s193 = sand.u32 %s27, 1
        %s194 = scalar_lea.sflag [#allocation3], %s193
        %s195 = sand.u32 %s27, 1
        %s196 = smul.addr %s195, 128
        %s197 = scalar_lea.vmem [#allocation2], %s196
        %p198 = pneg %p40
        %p199 = pneg %p37
        %s200 = sand.u32 %s61, 1
        %s201 = scalar_lea.sflag [#allocation5], %s200
        %s202 = sand.u32 %s61, 1
        %s203 = smul.addr %s202, 16
        %s204 = scalar_lea.vmem [#allocation4], %s203
        %p205 = pneg %p74
        %p206 = pneg %p71
        %p207 = pneg %p100
        %p208 = pneg %p97
        %p209 = scmp.lt.s32.totalorder %s19, 3
        %s210 = scalar_select %p209, %s19, 3
        %s211 = smul.addr %s210, 2
        %s212 = smul.addr %s211, 8
        %s213 = scalar_lea.vmem %s2, %s212
        %s214 = smul.u32 8, %s19
        %s215 = smul.u32 %s19, 8
        %s216 = ssub.s32 %s215, 1
        %p217 = scmp.gt.s32.totalorder %s216, 0
        %s218 = scalar_select %p217, %s216, 0
        %p219 = scmp.lt.s32.totalorder %s19, 3
        %s220 = scalar_select %p219, %s19, 3
        %s221 = smul.addr %s220, 2
        %s222 = smul.addr %s221, 8
        %s223 = scalar_lea.vmem %s2, %s222
        %v224 = vld [vmem:[%s177] sm:$0xff]
        %v225 = vld [vmem:[%s177 + $0x8] sm:$0xff]
        %v226 = vld [vmem:[%s177 + $0x10] sm:$0xff]
        %v227 = vld [vmem:[%s177 + $0x18] sm:$0xff]
        %v228 = vld [vmem:[%s177 + $0x20] sm:$0xff]
        %v229 = vld [vmem:[%s177 + $0x28] sm:$0xff]
        %v230 = vld [vmem:[%s177 + $0x30] sm:$0xff]
        %v231 = vld [vmem:[%s177 + $0x38] sm:$0xff]
        %v232 = vld [vmem:[%s177 + $0x40] sm:$0xff]
        %v233 = vld [vmem:[%s177 + $0x48] sm:$0xff]
        %v234 = vld [vmem:[%s177 + $0x50] sm:$0xff]
        %v235 = vld [vmem:[%s177 + $0x58] sm:$0xff]
        %v236 = vld [vmem:[%s177 + $0x60] sm:$0xff]
        %v237 = vld [vmem:[%s177 + $0x68] sm:$0xff]
        %v238 = vld [vmem:[%s177 + $0x70] sm:$0xff]
        %v239 = vld [vmem:[%s177 + $0x78] sm:$0xff]
        %240 = vst [vmem:[%s223] sm:$0xff] 0.0
        %241 = vst [vmem:[%s223 + $0x8] sm:$0xff] 0.0
        %258 = vrot.lane.b32.xlu0 %v224, 1
        %v259 = vpop.permute.xlu0 %258
        %260 = vrot.lane.b32.xlu0 %v225, 1
        %v261 = vpop.permute.xlu0 %260
        %262 = vrot.lane.b32.xlu0 %v226, 1
        %v263 = vpop.permute.xlu0 %262
        %264 = vrot.lane.b32.xlu0 %v227, 1
        %v265 = vpop.permute.xlu0 %264
        %266 = vrot.lane.b32.xlu0 %v228, 1
        %v267 = vpop.permute.xlu0 %266
        %268 = vrot.lane.b32.xlu0 %v229, 1
        %v269 = vpop.permute.xlu0 %268
        %270 = vrot.lane.b32.xlu0 %v230, 1
        %v271 = vpop.permute.xlu0 %270
        %272 = vrot.lane.b32.xlu0 %v231, 1
        %v273 = vpop.permute.xlu0 %272
        %274 = vrot.lane.b32.xlu0 %v232, 1
        %v275 = vpop.permute.xlu0 %274
        %276 = vrot.lane.b32.xlu0 %v233, 1
        %v277 = vpop.permute.xlu0 %276
        %278 = vrot.lane.b32.xlu0 %v234, 1
        %v279 = vpop.permute.xlu0 %278
        %280 = vrot.lane.b32.xlu0 %v235, 1
        %v281 = vpop.permute.xlu0 %280
        %282 = vrot.lane.b32.xlu0 %v236, 1
        %v283 = vpop.permute.xlu0 %282
        %284 = vrot.lane.b32.xlu0 %v237, 1
        %v285 = vpop.permute.xlu0 %284
        %286 = vrot.lane.b32.xlu0 %v238, 1
        %v287 = vpop.permute.xlu0 %286
        %288 = vrot.lane.b32.xlu0 %v239, 1
        %v289 = vpop.permute.xlu0 %288
        %vm290 = vcmask 7168
        %v291 = vsel %vm290, %v259, %v261
        %v292 = vsel %vm290, %v263, %v265
        %v293 = vsel %vm290, %v267, %v269
        %v294 = vsel %vm290, %v271, %v273
        %v295 = vsel %vm290, %v275, %v277
        %v296 = vsel %vm290, %v279, %v281
        %v297 = vsel %vm290, %v283, %v285
        %v298 = vsel %vm290, %v287, %v289
        %v315 = vsub.f32 %v224, %v259
        %v316 = vsub.f32 %v225, %v291
        %v317 = vsub.f32 %v226, %v263
        %v318 = vsub.f32 %v227, %v292
        %v319 = vsub.f32 %v228, %v267
        %v320 = vsub.f32 %v229, %v293
        %v321 = vsub.f32 %v230, %v271
        %v322 = vsub.f32 %v231, %v294
        %v323 = vsub.f32 %v232, %v275
        %v324 = vsub.f32 %v233, %v295
        %v325 = vsub.f32 %v234, %v279
        %v326 = vsub.f32 %v235, %v296
        %v327 = vsub.f32 %v236, %v283
        %v328 = vsub.f32 %v237, %v297
        %v329 = vsub.f32 %v238, %v287
        %v330 = vsub.f32 %v239, %v298
        %v331 = vand.u32 2147483647, %v315
        %v332 = vand.u32 2147483647, %v316
        %v333 = vand.u32 2147483647, %v317
        %v334 = vand.u32 2147483647, %v318
        %v335 = vand.u32 2147483647, %v319
        %v336 = vand.u32 2147483647, %v320
        %v337 = vand.u32 2147483647, %v321
        %v338 = vand.u32 2147483647, %v322
        %v339 = vand.u32 2147483647, %v323
        %v340 = vand.u32 2147483647, %v324
        %v341 = vand.u32 2147483647, %v325
        %v342 = vand.u32 2147483647, %v326
        %v343 = vand.u32 2147483647, %v327
        %v344 = vand.u32 2147483647, %v328
        %v345 = vand.u32 2147483647, %v329
        %v346 = vand.u32 2147483647, %v330
        %v347 = vadd.f32 %v331, 1e-10
        %v348 = vadd.f32 %v332, 1e-10
        %v349 = vadd.f32 %v333, 1e-10
        %v350 = vadd.f32 %v334, 1e-10
        %v351 = vadd.f32 %v335, 1e-10
        %v352 = vadd.f32 %v336, 1e-10
        %v353 = vadd.f32 %v337, 1e-10
        %v354 = vadd.f32 %v338, 1e-10
        %v355 = vadd.f32 %v339, 1e-10
        %v356 = vadd.f32 %v340, 1e-10
        %v357 = vadd.f32 %v341, 1e-10
        %v358 = vadd.f32 %v342, 1e-10
        %v359 = vadd.f32 %v343, 1e-10
        %v360 = vadd.f32 %v344, 1e-10
        %v361 = vadd.f32 %v345, 1e-10
        %v362 = vadd.f32 %v346, 1e-10
        %v363 = vrsqrt.pop %v347
        %v364 = vmul.f32 %v363, %v347
        %v365 = vmul.f32 %v364, %v363
        %v366 = vmul.f32 0.5, %v365
        %v367 = vsub.f32 1.5, %v366
        %v368 = vmul.f32 %v363, %v367
        %v369 = vmul.f32 %v347, %v368
        %vm370 = vcmp.eq.f32.partialorder %v347, inf
        %v371 = vsel %vm370, %v347, %v369
        %vm372 = vcmp.eq.f32.partialorder %v347, 0.0
        %v373 = vand.u32 %v347, 2147483648
        %v374 = vsel %vm372, %v373, %v371
        %v375 = vrsqrt.pop %v348
        %v376 = vmul.f32 %v375, %v348
        %v377 = vmul.f32 %v376, %v375
        %v378 = vmul.f32 0.5, %v377
        %v379 = vsub.f32 1.5, %v378
        %v380 = vmul.f32 %v375, %v379
        %v381 = vmul.f32 %v348, %v380
        %vm382 = vcmp.eq.f32.partialorder %v348, inf
        %v383 = vsel %vm382, %v348, %v381
        %vm384 = vcmp.eq.f32.partialorder %v348, 0.0
        %v385 = vand.u32 %v348, 2147483648
        %v386 = vsel %vm384, %v385, %v383
        %v387 = vrsqrt.pop %v349
        %v388 = vmul.f32 %v387, %v349
        %v389 = vmul.f32 %v388, %v387
        %v390 = vmul.f32 0.5, %v389
        %v391 = vsub.f32 1.5, %v390
        %v392 = vmul.f32 %v387, %v391
        %v393 = vmul.f32 %v349, %v392
        %vm394 = vcmp.eq.f32.partialorder %v349, inf
        %v395 = vsel %vm394, %v349, %v393
        %vm396 = vcmp.eq.f32.partialorder %v349, 0.0
        %v397 = vand.u32 %v349, 2147483648
        %v398 = vsel %vm396, %v397, %v395
        %v399 = vrsqrt.pop %v350
        %v400 = vmul.f32 %v399, %v350
        %v401 = vmul.f32 %v400, %v399
        %v402 = vmul.f32 0.5, %v401
        %v403 = vsub.f32 1.5, %v402
        %v404 = vmul.f32 %v399, %v403
        %v405 = vmul.f32 %v350, %v404
        %vm406 = vcmp.eq.f32.partialorder %v350, inf
        %v407 = vsel %vm406, %v350, %v405
        %vm408 = vcmp.eq.f32.partialorder %v350, 0.0
        %v409 = vand.u32 %v350, 2147483648
        %v410 = vsel %vm408, %v409, %v407
        %v411 = vrsqrt.pop %v351
        %v412 = vmul.f32 %v411, %v351
        %v413 = vmul.f32 %v412, %v411
        %v414 = vmul.f32 0.5, %v413
        %v415 = vsub.f32 1.5, %v414
        %v416 = vmul.f32 %v411, %v415
        %v417 = vmul.f32 %v351, %v416
        %vm418 = vcmp.eq.f32.partialorder %v351, inf
        %v419 = vsel %vm418, %v351, %v417
        %vm420 = vcmp.eq.f32.partialorder %v351, 0.0
        %v421 = vand.u32 %v351, 2147483648
        %v422 = vsel %vm420, %v421, %v419
        %v423 = vrsqrt.pop %v352
        %v424 = vmul.f32 %v423, %v352
        %v425 = vmul.f32 %v424, %v423
        %v426 = vmul.f32 0.5, %v425
        %v427 = vsub.f32 1.5, %v426
        %v428 = vmul.f32 %v423, %v427
        %v429 = vmul.f32 %v352, %v428
        %vm430 = vcmp.eq.f32.partialorder %v352, inf
        %v431 = vsel %vm430, %v352, %v429
        %vm432 = vcmp.eq.f32.partialorder %v352, 0.0
        %v433 = vand.u32 %v352, 2147483648
        %v434 = vsel %vm432, %v433, %v431
        %v435 = vrsqrt.pop %v353
        %v436 = vmul.f32 %v435, %v353
        %v437 = vmul.f32 %v436, %v435
        %v438 = vmul.f32 0.5, %v437
        %v439 = vsub.f32 1.5, %v438
        %v440 = vmul.f32 %v435, %v439
        %v441 = vmul.f32 %v353, %v440
        %vm442 = vcmp.eq.f32.partialorder %v353, inf
        %v443 = vsel %vm442, %v353, %v441
        %vm444 = vcmp.eq.f32.partialorder %v353, 0.0
        %v445 = vand.u32 %v353, 2147483648
        %v446 = vsel %vm444, %v445, %v443
        %v447 = vrsqrt.pop %v354
        %v448 = vmul.f32 %v447, %v354
        %v449 = vmul.f32 %v448, %v447
        %v450 = vmul.f32 0.5, %v449
        %v451 = vsub.f32 1.5, %v450
        %v452 = vmul.f32 %v447, %v451
        %v453 = vmul.f32 %v354, %v452
        %vm454 = vcmp.eq.f32.partialorder %v354, inf
        %v455 = vsel %vm454, %v354, %v453
        %vm456 = vcmp.eq.f32.partialorder %v354, 0.0
        %v457 = vand.u32 %v354, 2147483648
        %v458 = vsel %vm456, %v457, %v455
        %v459 = vrsqrt.pop %v355
        %v460 = vmul.f32 %v459, %v355
        %v461 = vmul.f32 %v460, %v459
        %v462 = vmul.f32 0.5, %v461
        %v463 = vsub.f32 1.5, %v462
        %v464 = vmul.f32 %v459, %v463
        %v465 = vmul.f32 %v355, %v464
        %vm466 = vcmp.eq.f32.partialorder %v355, inf
        %v467 = vsel %vm466, %v355, %v465
        %vm468 = vcmp.eq.f32.partialorder %v355, 0.0
        %v469 = vand.u32 %v355, 2147483648
        %v470 = vsel %vm468, %v469, %v467
        %v471 = vrsqrt.pop %v356
        %v472 = vmul.f32 %v471, %v356
        %v473 = vmul.f32 %v472, %v471
        %v474 = vmul.f32 0.5, %v473
        %v475 = vsub.f32 1.5, %v474
        %v476 = vmul.f32 %v471, %v475
        %v477 = vmul.f32 %v356, %v476
        %vm478 = vcmp.eq.f32.partialorder %v356, inf
        %v479 = vsel %vm478, %v356, %v477
        %vm480 = vcmp.eq.f32.partialorder %v356, 0.0
        %v481 = vand.u32 %v356, 2147483648
        %v482 = vsel %vm480, %v481, %v479
        %v483 = vrsqrt.pop %v357
        %v484 = vmul.f32 %v483, %v357
        %v485 = vmul.f32 %v484, %v483
        %v486 = vmul.f32 0.5, %v485
        %v487 = vsub.f32 1.5, %v486
        %v488 = vmul.f32 %v483, %v487
        %v489 = vmul.f32 %v357, %v488
        %vm490 = vcmp.eq.f32.partialorder %v357, inf
        %v491 = vsel %vm490, %v357, %v489
        %vm492 = vcmp.eq.f32.partialorder %v357, 0.0
        %v493 = vand.u32 %v357, 2147483648
        %v494 = vsel %vm492, %v493, %v491
        %v495 = vrsqrt.pop %v358
        %v496 = vmul.f32 %v495, %v358
        %v497 = vmul.f32 %v496, %v495
        %v498 = vmul.f32 0.5, %v497
        %v499 = vsub.f32 1.5, %v498
        %v500 = vmul.f32 %v495, %v499
        %v501 = vmul.f32 %v358, %v500
        %vm502 = vcmp.eq.f32.partialorder %v358, inf
        %v503 = vsel %vm502, %v358, %v501
        %vm504 = vcmp.eq.f32.partialorder %v358, 0.0
        %v505 = vand.u32 %v358, 2147483648
        %v506 = vsel %vm504, %v505, %v503
        %v507 = vrsqrt.pop %v359
        %v508 = vmul.f32 %v507, %v359
        %v509 = vmul.f32 %v508, %v507
        %v510 = vmul.f32 0.5, %v509
        %v511 = vsub.f32 1.5, %v510
        %v512 = vmul.f32 %v507, %v511
        %v513 = vmul.f32 %v359, %v512
        %vm514 = vcmp.eq.f32.partialorder %v359, inf
        %v515 = vsel %vm514, %v359, %v513
        %vm516 = vcmp.eq.f32.partialorder %v359, 0.0
        %v517 = vand.u32 %v359, 2147483648
        %v518 = vsel %vm516, %v517, %v515
        %v519 = vrsqrt.pop %v360
        %v520 = vmul.f32 %v519, %v360
        %v521 = vmul.f32 %v520, %v519
        %v522 = vmul.f32 0.5, %v521
        %v523 = vsub.f32 1.5, %v522
        %v524 = vmul.f32 %v519, %v523
        %v525 = vmul.f32 %v360, %v524
        %vm526 = vcmp.eq.f32.partialorder %v360, inf
        %v527 = vsel %vm526, %v360, %v525
        %vm528 = vcmp.eq.f32.partialorder %v360, 0.0
        %v529 = vand.u32 %v360, 2147483648
        %v530 = vsel %vm528, %v529, %v527
        %v531 = vrsqrt.pop %v361
        %v532 = vmul.f32 %v531, %v361
        %v533 = vmul.f32 %v532, %v531
        %v534 = vmul.f32 0.5, %v533
        %v535 = vsub.f32 1.5, %v534
        %v536 = vmul.f32 %v531, %v535
        %v537 = vmul.f32 %v361, %v536
        %vm538 = vcmp.eq.f32.partialorder %v361, inf
        %v539 = vsel %vm538, %v361, %v537
        %vm540 = vcmp.eq.f32.partialorder %v361, 0.0
        %v541 = vand.u32 %v361, 2147483648
        %v542 = vsel %vm540, %v541, %v539
        %v543 = vrsqrt.pop %v362
        %v544 = vmul.f32 %v543, %v362
        %v545 = vmul.f32 %v544, %v543
        %v546 = vmul.f32 0.5, %v545
        %v547 = vsub.f32 1.5, %v546
        %v548 = vmul.f32 %v543, %v547
        %v549 = vmul.f32 %v362, %v548
        %vm550 = vcmp.eq.f32.partialorder %v362, inf
        %v551 = vsel %vm550, %v362, %v549
        %vm552 = vcmp.eq.f32.partialorder %v362, 0.0
        %v553 = vand.u32 %v362, 2147483648
        %v554 = vsel %vm552, %v553, %v551
        %vm555 = vcmask 1047560
        %v556 = vsel %vm555, %v374, 0.0
        %v557 = vsel %vm555, %v398, 0.0
        %v558 = vadd.f32 %v556, %v557
        %v559 = vsel %vm555, %v422, 0.0
        %v560 = vadd.f32 %v558, %v559
        %v561 = vsel %vm555, %v446, 0.0
        %v562 = vadd.f32 %v560, %v561
        %v563 = vsel %vm555, %v470, 0.0
        %v564 = vadd.f32 %v562, %v563
        %v565 = vsel %vm555, %v494, 0.0
        %v566 = vadd.f32 %v564, %v565
        %v567 = vsel %vm555, %v518, 0.0
        %v568 = vadd.f32 %v566, %v567
        %v569 = vsel %vm555, %v542, 0.0
        %v570 = vadd.f32 %v568, %v569
        %v571 = vrot.slane %v570, 4
        %v572 = vadd.f32 %v570, %v571
        %v573 = vrot.slane %v572, 2
        %v574 = vadd.f32 %v572, %v573
        %v575 = vrot.slane %v574, 1
        %v576 = vadd.f32 %v574, %v575
        %v577 = vadd.f32 %v386, %v410
        %v578 = vadd.f32 %v577, %v434
        %v579 = vadd.f32 %v578, %v458
        %v580 = vadd.f32 %v579, %v482
        %v581 = vadd.f32 %v580, %v506
        %v582 = vadd.f32 %v581, %v530
        %v583 = vadd.f32 %v582, %v554
        %v584 = vrot.slane %v583, 4
        %v585 = vadd.f32 %v583, %v584
        %v586 = vrot.slane %v585, 2
        %v587 = vadd.f32 %v585, %v586
        %v588 = vrot.slane %v587, 1
        %v589 = vadd.f32 %v587, %v588
        %v592 = vrot.slane %v589, 7
        %vm593 = vcmask 1040384
        %v594 = vsel %vm593, %v576, %v592
        %595 = vrot.lane.b32.xlu0 %v594, 127
        %v596 = vpop.permute.xlu0 %595
        %v597 = vrot.slane %v596, 1
        %vm598 = vcmask 1039360
        %v599 = vsel %vm598, %v596, %v597
        %v601 = vlaneseq
        %vm602 = vcmp.ge.s32.totalorder %v601, 0
        %vm603 = vcmp.lt.s32.totalorder %v601, 255
        %vm604 = vmand %vm602, %vm603
        %s605 = scalar_lea.vmem %s223, 1
        %606 = vst.msk [vmem:[%s605] ss:$8 sm:$0x3] %vm604, %v599
        %607 = vst.msk [vmem:[%s605] ss:$8 sm:$0x0] %vm604, %v599
        %v608 = vrot.slane %v224, 7
        %v609 = vrot.slane %v225, 7
        %v610 = vrot.slane %v226, 7
        %v611 = vsel %vm593, %v608, %v610
        %v612 = vrot.slane %v227, 7
        %v613 = vsel %vm593, %v609, %v612
        %v614 = vrot.slane %v228, 7
        %v615 = vsel %vm593, %v610, %v614
        %v616 = vrot.slane %v229, 7
        %v617 = vsel %vm593, %v612, %v616
        %v618 = vrot.slane %v230, 7
        %v619 = vsel %vm593, %v614, %v618
        %v620 = vrot.slane %v231, 7
        %v621 = vsel %vm593, %v616, %v620
        %v622 = vrot.slane %v232, 7
        %v623 = vsel %vm593, %v618, %v622
        %v624 = vrot.slane %v233, 7
        %v625 = vsel %vm593, %v620, %v624
        %v626 = vrot.slane %v234, 7
        %v627 = vsel %vm593, %v622, %v626
        %v628 = vrot.slane %v235, 7
        %v629 = vsel %vm593, %v624, %v628
        %v630 = vrot.slane %v236, 7
        %v631 = vsel %vm593, %v626, %v630
        %v632 = vrot.slane %v237, 7
        %v633 = vsel %vm593, %v628, %v632
        %v634 = vrot.slane %v238, 7
        %v635 = vsel %vm593, %v630, %v634
        %v636 = vrot.slane %v239, 7
        %v637 = vsel %vm593, %v632, %v636
        %v654 = vsub.f32 %v224, %v608
        %v655 = vsub.f32 %v225, %v609
        %v656 = vsub.f32 %v226, %v611
        %v657 = vsub.f32 %v227, %v613
        %v658 = vsub.f32 %v228, %v615
        %v659 = vsub.f32 %v229, %v617
        %v660 = vsub.f32 %v230, %v619
        %v661 = vsub.f32 %v231, %v621
        %v662 = vsub.f32 %v232, %v623
        %v663 = vsub.f32 %v233, %v625
        %v664 = vsub.f32 %v234, %v627
        %v665 = vsub.f32 %v235, %v629
        %v666 = vsub.f32 %v236, %v631
        %v667 = vsub.f32 %v237, %v633
        %v668 = vsub.f32 %v238, %v635
        %v669 = vsub.f32 %v239, %v637
        %v670 = vand.u32 2147483647, %v654
        %v671 = vand.u32 2147483647, %v655
        %v672 = vand.u32 2147483647, %v656
        %v673 = vand.u32 2147483647, %v657
        %v674 = vand.u32 2147483647, %v658
        %v675 = vand.u32 2147483647, %v659
        %v676 = vand.u32 2147483647, %v660
        %v677 = vand.u32 2147483647, %v661
        %v678 = vand.u32 2147483647, %v662
        %v679 = vand.u32 2147483647, %v663
        %v680 = vand.u32 2147483647, %v664
        %v681 = vand.u32 2147483647, %v665
        %v682 = vand.u32 2147483647, %v666
        %v683 = vand.u32 2147483647, %v667
        %v684 = vand.u32 2147483647, %v668
        %v685 = vand.u32 2147483647, %v669
        %v686 = vadd.f32 %v670, 1e-10
        %v687 = vadd.f32 %v671, 1e-10
        %v688 = vadd.f32 %v672, 1e-10
        %v689 = vadd.f32 %v673, 1e-10
        %v690 = vadd.f32 %v674, 1e-10
        %v691 = vadd.f32 %v675, 1e-10
        %v692 = vadd.f32 %v676, 1e-10
        %v693 = vadd.f32 %v677, 1e-10
        %v694 = vadd.f32 %v678, 1e-10
        %v695 = vadd.f32 %v679, 1e-10
        %v696 = vadd.f32 %v680, 1e-10
        %v697 = vadd.f32 %v681, 1e-10
        %v698 = vadd.f32 %v682, 1e-10
        %v699 = vadd.f32 %v683, 1e-10
        %v700 = vadd.f32 %v684, 1e-10
        %v701 = vadd.f32 %v685, 1e-10
        %v702 = vrsqrt.pop %v686
        %v703 = vmul.f32 %v702, %v686
        %v704 = vmul.f32 %v703, %v702
        %v705 = vmul.f32 0.5, %v704
        %v706 = vsub.f32 1.5, %v705
        %v707 = vmul.f32 %v702, %v706
        %v708 = vmul.f32 %v686, %v707
        %vm709 = vcmp.eq.f32.partialorder %v686, inf
        %v710 = vsel %vm709, %v686, %v708
        %vm711 = vcmp.eq.f32.partialorder %v686, 0.0
        %v712 = vand.u32 %v686, 2147483648
        %v713 = vsel %vm711, %v712, %v710
        %v714 = vrsqrt.pop %v687
        %v715 = vmul.f32 %v714, %v687
        %v716 = vmul.f32 %v715, %v714
        %v717 = vmul.f32 0.5, %v716
        %v718 = vsub.f32 1.5, %v717
        %v719 = vmul.f32 %v714, %v718
        %v720 = vmul.f32 %v687, %v719
        %vm721 = vcmp.eq.f32.partialorder %v687, inf
        %v722 = vsel %vm721, %v687, %v720
        %vm723 = vcmp.eq.f32.partialorder %v687, 0.0
        %v724 = vand.u32 %v687, 2147483648
        %v725 = vsel %vm723, %v724, %v722
        %v726 = vrsqrt.pop %v688
        %v727 = vmul.f32 %v726, %v688
        %v728 = vmul.f32 %v727, %v726
        %v729 = vmul.f32 0.5, %v728
        %v730 = vsub.f32 1.5, %v729
        %v731 = vmul.f32 %v726, %v730
        %v732 = vmul.f32 %v688, %v731
        %vm733 = vcmp.eq.f32.partialorder %v688, inf
        %v734 = vsel %vm733, %v688, %v732
        %vm735 = vcmp.eq.f32.partialorder %v688, 0.0
        %v736 = vand.u32 %v688, 2147483648
        %v737 = vsel %vm735, %v736, %v734
        %v738 = vrsqrt.pop %v689
        %v739 = vmul.f32 %v738, %v689
        %v740 = vmul.f32 %v739, %v738
        %v741 = vmul.f32 0.5, %v740
        %v742 = vsub.f32 1.5, %v741
        %v743 = vmul.f32 %v738, %v742
        %v744 = vmul.f32 %v689, %v743
        %vm745 = vcmp.eq.f32.partialorder %v689, inf
        %v746 = vsel %vm745, %v689, %v744
        %vm747 = vcmp.eq.f32.partialorder %v689, 0.0
        %v748 = vand.u32 %v689, 2147483648
        %v749 = vsel %vm747, %v748, %v746
        %v750 = vrsqrt.pop %v690
        %v751 = vmul.f32 %v750, %v690
        %v752 = vmul.f32 %v751, %v750
        %v753 = vmul.f32 0.5, %v752
        %v754 = vsub.f32 1.5, %v753
        %v755 = vmul.f32 %v750, %v754
        %v756 = vmul.f32 %v690, %v755
        %vm757 = vcmp.eq.f32.partialorder %v690, inf
        %v758 = vsel %vm757, %v690, %v756
        %vm759 = vcmp.eq.f32.partialorder %v690, 0.0
        %v760 = vand.u32 %v690, 2147483648
        %v761 = vsel %vm759, %v760, %v758
        %v762 = vrsqrt.pop %v691
        %v763 = vmul.f32 %v762, %v691
        %v764 = vmul.f32 %v763, %v762
        %v765 = vmul.f32 0.5, %v764
        %v766 = vsub.f32 1.5, %v765
        %v767 = vmul.f32 %v762, %v766
        %v768 = vmul.f32 %v691, %v767
        %vm769 = vcmp.eq.f32.partialorder %v691, inf
        %v770 = vsel %vm769, %v691, %v768
        %vm771 = vcmp.eq.f32.partialorder %v691, 0.0
        %v772 = vand.u32 %v691, 2147483648
        %v773 = vsel %vm771, %v772, %v770
        %v774 = vrsqrt.pop %v692
        %v775 = vmul.f32 %v774, %v692
        %v776 = vmul.f32 %v775, %v774
        %v777 = vmul.f32 0.5, %v776
        %v778 = vsub.f32 1.5, %v777
        %v779 = vmul.f32 %v774, %v778
        %v780 = vmul.f32 %v692, %v779
        %vm781 = vcmp.eq.f32.partialorder %v692, inf
        %v782 = vsel %vm781, %v692, %v780
        %vm783 = vcmp.eq.f32.partialorder %v692, 0.0
        %v784 = vand.u32 %v692, 2147483648
        %v785 = vsel %vm783, %v784, %v782
        %v786 = vrsqrt.pop %v693
        %v787 = vmul.f32 %v786, %v693
        %v788 = vmul.f32 %v787, %v786
        %v789 = vmul.f32 0.5, %v788
        %v790 = vsub.f32 1.5, %v789
        %v791 = vmul.f32 %v786, %v790
        %v792 = vmul.f32 %v693, %v791
        %vm793 = vcmp.eq.f32.partialorder %v693, inf
        %v794 = vsel %vm793, %v693, %v792
        %vm795 = vcmp.eq.f32.partialorder %v693, 0.0
        %v796 = vand.u32 %v693, 2147483648
        %v797 = vsel %vm795, %v796, %v794
        %v798 = vrsqrt.pop %v694
        %v799 = vmul.f32 %v798, %v694
        %v800 = vmul.f32 %v799, %v798
        %v801 = vmul.f32 0.5, %v800
        %v802 = vsub.f32 1.5, %v801
        %v803 = vmul.f32 %v798, %v802
        %v804 = vmul.f32 %v694, %v803
        %vm805 = vcmp.eq.f32.partialorder %v694, inf
        %v806 = vsel %vm805, %v694, %v804
        %vm807 = vcmp.eq.f32.partialorder %v694, 0.0
        %v808 = vand.u32 %v694, 2147483648
        %v809 = vsel %vm807, %v808, %v806
        %v810 = vrsqrt.pop %v695
        %v811 = vmul.f32 %v810, %v695
        %v812 = vmul.f32 %v811, %v810
        %v813 = vmul.f32 0.5, %v812
        %v814 = vsub.f32 1.5, %v813
        %v815 = vmul.f32 %v810, %v814
        %v816 = vmul.f32 %v695, %v815
        %vm817 = vcmp.eq.f32.partialorder %v695, inf
        %v818 = vsel %vm817, %v695, %v816
        %vm819 = vcmp.eq.f32.partialorder %v695, 0.0
        %v820 = vand.u32 %v695, 2147483648
        %v821 = vsel %vm819, %v820, %v818
        %v822 = vrsqrt.pop %v696
        %v823 = vmul.f32 %v822, %v696
        %v824 = vmul.f32 %v823, %v822
        %v825 = vmul.f32 0.5, %v824
        %v826 = vsub.f32 1.5, %v825
        %v827 = vmul.f32 %v822, %v826
        %v828 = vmul.f32 %v696, %v827
        %vm829 = vcmp.eq.f32.partialorder %v696, inf
        %v830 = vsel %vm829, %v696, %v828
        %vm831 = vcmp.eq.f32.partialorder %v696, 0.0
        %v832 = vand.u32 %v696, 2147483648
        %v833 = vsel %vm831, %v832, %v830
        %v834 = vrsqrt.pop %v697
        %v835 = vmul.f32 %v834, %v697
        %v836 = vmul.f32 %v835, %v834
        %v837 = vmul.f32 0.5, %v836
        %v838 = vsub.f32 1.5, %v837
        %v839 = vmul.f32 %v834, %v838
        %v840 = vmul.f32 %v697, %v839
        %vm841 = vcmp.eq.f32.partialorder %v697, inf
        %v842 = vsel %vm841, %v697, %v840
        %vm843 = vcmp.eq.f32.partialorder %v697, 0.0
        %v844 = vand.u32 %v697, 2147483648
        %v845 = vsel %vm843, %v844, %v842
        %v846 = vrsqrt.pop %v698
        %v847 = vmul.f32 %v846, %v698
        %v848 = vmul.f32 %v847, %v846
        %v849 = vmul.f32 0.5, %v848
        %v850 = vsub.f32 1.5, %v849
        %v851 = vmul.f32 %v846, %v850
        %v852 = vmul.f32 %v698, %v851
        %vm853 = vcmp.eq.f32.partialorder %v698, inf
        %v854 = vsel %vm853, %v698, %v852
        %vm855 = vcmp.eq.f32.partialorder %v698, 0.0
        %v856 = vand.u32 %v698, 2147483648
        %v857 = vsel %vm855, %v856, %v854
        %v858 = vrsqrt.pop %v699
        %v859 = vmul.f32 %v858, %v699
        %v860 = vmul.f32 %v859, %v858
        %v861 = vmul.f32 0.5, %v860
        %v862 = vsub.f32 1.5, %v861
        %v863 = vmul.f32 %v858, %v862
        %v864 = vmul.f32 %v699, %v863
        %vm865 = vcmp.eq.f32.partialorder %v699, inf
        %v866 = vsel %vm865, %v699, %v864
        %vm867 = vcmp.eq.f32.partialorder %v699, 0.0
        %v868 = vand.u32 %v699, 2147483648
        %v869 = vsel %vm867, %v868, %v866
        %v870 = vrsqrt.pop %v700
        %v871 = vmul.f32 %v870, %v700
        %v872 = vmul.f32 %v871, %v870
        %v873 = vmul.f32 0.5, %v872
        %v874 = vsub.f32 1.5, %v873
        %v875 = vmul.f32 %v870, %v874
        %v876 = vmul.f32 %v700, %v875
        %vm877 = vcmp.eq.f32.partialorder %v700, inf
        %v878 = vsel %vm877, %v700, %v876
        %vm879 = vcmp.eq.f32.partialorder %v700, 0.0
        %v880 = vand.u32 %v700, 2147483648
        %v881 = vsel %vm879, %v880, %v878
        %v882 = vrsqrt.pop %v701
        %v883 = vmul.f32 %v882, %v701
        %v884 = vmul.f32 %v883, %v882
        %v885 = vmul.f32 0.5, %v884
        %v886 = vsub.f32 1.5, %v885
        %v887 = vmul.f32 %v882, %v886
        %v888 = vmul.f32 %v701, %v887
        %vm889 = vcmp.eq.f32.partialorder %v701, inf
        %v890 = vsel %vm889, %v701, %v888
        %vm891 = vcmp.eq.f32.partialorder %v701, 0.0
        %v892 = vand.u32 %v701, 2147483648
        %v893 = vsel %vm891, %v892, %v890
        %vm910 = vcmask 1046528
        %v911 = vrot.slane %v713, 1
        %v912 = vrot.slane %v737, 1
        %v913 = vsel %vm910, %v911, %v912
        %v914 = vrot.slane %v725, 1
        %v915 = vrot.slane %v749, 1
        %v916 = vsel %vm910, %v914, %v915
        %v917 = vrot.slane %v761, 1
        %v918 = vsel %vm910, %v912, %v917
        %v919 = vrot.slane %v773, 1
        %v920 = vsel %vm910, %v915, %v919
        %v921 = vrot.slane %v785, 1
        %v922 = vsel %vm910, %v917, %v921
        %v923 = vrot.slane %v797, 1
        %v924 = vsel %vm910, %v919, %v923
        %v925 = vrot.slane %v809, 1
        %v926 = vsel %vm910, %v921, %v925
        %v927 = vrot.slane %v821, 1
        %v928 = vsel %vm910, %v923, %v927
        %v929 = vrot.slane %v833, 1
        %v930 = vsel %vm910, %v925, %v929
        %v931 = vrot.slane %v845, 1
        %v932 = vsel %vm910, %v927, %v931
        %v933 = vrot.slane %v857, 1
        %v934 = vsel %vm910, %v929, %v933
        %v935 = vrot.slane %v869, 1
        %v936 = vsel %vm910, %v931, %v935
        %v937 = vrot.slane %v881, 1
        %v938 = vsel %vm910, %v933, %v937
        %v939 = vrot.slane %v893, 1
        %v940 = vsel %vm910, %v935, %v939
        %v957 = vadd.f32 %v913, %v918
        %v958 = vadd.f32 %v957, %v922
        %v959 = vadd.f32 %v958, %v926
        %v960 = vadd.f32 %v959, %v930
        %v961 = vadd.f32 %v960, %v934
        %v962 = vadd.f32 %v961, %v938
        %v963 = vsel %vm910, %v937, 0.0
        %v964 = vadd.f32 %v962, %v963
        %v965 = vrot.slane %v964, 4
        %v966 = vadd.f32 %v964, %v965
        %v967 = vrot.slane %v966, 2
        %v968 = vadd.f32 %v966, %v967
        %v969 = vrot.slane %v968, 1
        %v970 = vadd.f32 %v968, %v969
        %v971 = vadd.f32 %v916, %v920
        %v972 = vadd.f32 %v971, %v924
        %v973 = vadd.f32 %v972, %v928
        %v974 = vadd.f32 %v973, %v932
        %v975 = vadd.f32 %v974, %v936
        %v976 = vadd.f32 %v975, %v940
        %v977 = vsel %vm910, %v939, 0.0
        %v978 = vadd.f32 %v976, %v977
        %v979 = vrot.slane %v978, 4
        %v980 = vadd.f32 %v978, %v979
        %v981 = vrot.slane %v980, 2
        %v982 = vadd.f32 %v980, %v981
        %v983 = vrot.slane %v982, 1
        %v984 = vadd.f32 %v982, %v983
        %v987 = vrot.slane %v984, 7
        %v988 = vsel %vm593, %v970, %v987
        %vm990 = vcmp.lt.s32.totalorder %v601, 256
        %vm991 = vmand %vm602, %vm990
        %992 = vst.msk [vmem:[%s223] ss:$8 sm:$0x3] %vm991, %v988
        %993 = vst.msk [vmem:[%s223] ss:$8 sm:$0x0] %vm991, %v988
        %p994 = scmp.gt.s32.totalorder %s19, 0
        // Predicated region
        $region37: #{_lambda_.1} parent=27 // pred_check
          %p995 = pneg %p994
        $region38: #{_lambda_.1} parent=27 // pred_check_branch
          %997 = sbr.rel (%p995) target = $region40
        $region39: #{_lambda_.1} parent=27 // pred_region
          %s998 = scalar_lea.vmem %s187, 7 [#allocation4]
          %v999 = vld [vmem:[%s998] ss:$8 sm:$0x3]
          %v1001 = vperm.slane %v999, 0
          %v1002 = vperm.slane %v999, 1
          %v1005 = vsub.f32 %v224, %v1001
          %v1006 = vsub.f32 %v225, %v1002
          %v1007 = vand.u32 2147483647, %v1005
          %v1008 = vand.u32 2147483647, %v1006
          %v1009 = vadd.f32 %v1007, 1e-10
          %v1010 = vadd.f32 %v1008, 1e-10
          %v1011 = vrsqrt.pop %v1009
          %v1012 = vmul.f32 %v1011, %v1009
          %v1013 = vmul.f32 %v1012, %v1011
          %v1014 = vmul.f32 0.5, %v1013
          %v1015 = vsub.f32 1.5, %v1014
          %v1016 = vmul.f32 %v1011, %v1015
          %v1017 = vmul.f32 %v1009, %v1016
          %vm1018 = vcmp.eq.f32.partialorder %v1009, inf
          %v1019 = vsel %vm1018, %v1009, %v1017
          %vm1020 = vcmp.eq.f32.partialorder %v1009, 0.0
          %v1021 = vand.u32 %v1009, 2147483648
          %v1022 = vsel %vm1020, %v1021, %v1019
          %v1023 = vrsqrt.pop %v1010
          %v1024 = vmul.f32 %v1023, %v1010
          %v1025 = vmul.f32 %v1024, %v1023
          %v1026 = vmul.f32 0.5, %v1025
          %v1027 = vsub.f32 1.5, %v1026
          %v1028 = vmul.f32 %v1023, %v1027
          %v1029 = vmul.f32 %v1010, %v1028
          %vm1030 = vcmp.eq.f32.partialorder %v1010, inf
          %v1031 = vsel %vm1030, %v1010, %v1029
          %vm1032 = vcmp.eq.f32.partialorder %v1010, 0.0
          %v1033 = vand.u32 %v1010, 2147483648
          %v1034 = vsel %vm1032, %v1033, %v1031
          %v1035 = vld [vmem:[%s223] ss:$8 sm:$0x3]
          %v1038 = vrot.slane %v1034, 7
          %v1039 = vsel %vm593, %v1022, %v1038
          %v1041 = vadd.f32 %v1035, %v1039
          %1042 = vst.msk [vmem:[%s223] ss:$8 sm:$0x3] %vm991, %v1041
          %1043 = vst.msk [vmem:[%s223] ss:$8 sm:$0x0] %vm991, %v1041
        $region40: #{_lambda_.1} parent=27 // pred_fallthru
          _
        %p1044 = scmp.lt.s32.totalorder %s19, 3
        %s1045 = scalar_select %p1044, %s19, 3
        %s1046 = smul.addr %s1045, 2
        %s1047 = smul.addr %s1046, 8
        %s1048 = scalar_lea.vmem %s2, %s1047
        // Predicated region
        $region41: #{_lambda_.1} parent=27 // pred_check
          %p1049 = pneg %p97
        $region42: #{_lambda_.1} parent=27 // pred_check_branch
          %1051 = sbr.rel (%p1049) target = $region44
        $region43: #{_lambda_.1} parent=27 // pred_region
          _
        $region44: #{_lambda_.1} parent=27 // pred_fallthru
          _
      $region28: #{_lambda_.1} parent=5 // pred_fallthru
        _
      %p1052 = scmp.le.s32.totalorder 2, %s14
      // Predicated region
      $region45: #{_lambda_.1} parent=5 // pred_check
        %p1053 = pneg %p1052
      $region46: #{_lambda_.1} parent=5 // pred_check_branch
        %1055 = sbr.rel (%p1053) target = $region48
      $region47: #{_lambda_.1} parent=5 // pred_region
        %s1056 = ssub.s32 %s14, 2
        // Predicated region
        $region49: #{_lambda_.1} parent=47 // pred_check
          %p1057 = pneg %p103
        $region50: #{_lambda_.1} parent=47 // pred_check_branch
          %1059 = sbr.rel (%p1057) target = $region52
        $region51: #{_lambda_.1} parent=47 // pred_region
          %p1060 = scmp.lt.s32.totalorder %s20, 3
          %s1061 = scalar_select %p1060, %s20, 3
          %s1062 = smul.addr %s1061, 2
          %s1063 = smul.addr %s1062, 8
          %s1064 = scalar_lea.vmem %s2, %s1063
        $region52: #{_lambda_.1} parent=47 // pred_fallthru
          _
      $region48: #{_lambda_.1} parent=5 // pred_fallthru
        _
    $region6: #{_lambda_.1} parent=1 // loop_footer
      %s18 = sadd.s32 1, %s14
    $region7: #{_lambda_.1} parent=1 // loop_footer_branch
      %13 = sbr.rel target = $region3
    $region8: #{_lambda_.1} parent=1 // loop_exit
      _
    %1065 = vsyncpa [#allocation3], 1
    %s1066 = scalar_lea.sflag [#allocation3], 1
    %1067 = vsyncpa %s1066, 1
    %1068 = vsyncpa [#allocation5], 1
    %s1069 = scalar_lea.sflag [#allocation5], 1
    %1070 = vsyncpa %s1069, 1

</llo_original>
